<compile_context>
chip_gen: v7x
topology: tpu7x:2x2x1
jax: 0.10.0
libtpu: 0.0.40
codegen_flags: <defaults>
</compile_context>

<pallas_src>
import jax
import jax.numpy as jnp
from jax.experimental import pallas as pl
from jax.experimental.pallas import tpu as pltpu


def _round_up(v, m):
    return ((v + m - 1) // m) * m


def _plan_tiles(n, max_tile=16384):
    """Pick (tile, n_pad) with tile a multiple of 128, n_pad % tile == 0,
    >=2 grid steps when the batch is big enough (v7x megacore), and small
    padding waste (<~ steps*128 extra lanes)."""
    n128 = _round_up(max(n, 1), 128)
    if n128 <= 128:
        return 128, 128
    steps = max(2, pl.cdiv(n128, max_tile))
    tile = min(_round_up(pl.cdiv(n128, steps), 128), max_tile)
    n_pad = _round_up(n128, tile)
    return tile, n_pad


def _mlp_kernel(x_ref, w1_ref, b1_ref, w2_ref, b2_ref, w3_ref, b3_ref, o_ref):
    # x_ref: (1, TILE) f32            batch on lanes
    # w1_ref/b1_ref/b2_ref/w3_ref: (64, 1) f32   column vectors (lane broadcast)
    # w2_ref: (64, 64) bf16           torch layout (out, in)
    # b3_ref: (1, 1) f32
    x = x_ref[...]                                            # (1, TILE)

    # layer1: K=1 outer product on the VPU (f32): (64,1)*(1,TILE) -> (64,TILE)
    h1 = jnp.maximum(w1_ref[...] * x + b1_ref[...], 0.0)

    # layer2: the only real matmul -> MXU with bf16 operands, f32 accumulation
    h2 = jnp.dot(w2_ref[...], h1.astype(jnp.bfloat16),
                 preferred_element_type=jnp.float32)          # (64, TILE) f32
    h2 = jnp.maximum(h2 + b2_ref[...], 0.0)

    # layer3: out=1 reduction. 7 VALU adds over (8,TILE) sublane slices,
    # then a single sublane (XLU) reduce per 128-lane column.
    prod = h2 * w3_ref[...]                                   # (64, TILE) f32
    h = prod.shape[0]
    acc = prod[0:8, :]
    for k in range(1, h // 8):
        acc = acc + prod[8 * k: 8 * (k + 1), :]
    out = jnp.sum(acc, axis=0, keepdims=True) + b3_ref[...]   # (1, TILE)
    o_ref[...] = out.astype(o_ref.dtype)


def cosine_module_forward(x, w1, b1, w2, b2, w3, b3, *, max_tile=16384):
    """Fused MLP forward matching CosineModule.

    x:  (N, 1) float32
    Weights in torch layout:
      w1: (64, 1),  b1: (64,)
      w2: (64, 64), b2: (64,)
      w3: (1, 64),  b3: (1,)
    returns: (N, 1) float32
    """
    N = x.shape[0]
    H = w1.shape[0]
    assert H % 8 == 0, "hidden size must be a multiple of 8"

    tile, n_pad = _plan_tiles(N, max_tile=max_tile)

    # Batch on the lane axis; pad with zeros (padding lanes sliced off below).
    x_row = jnp.zeros((1, n_pad), x.dtype).at[0, :N].set(x[:, 0])

    # Parameters reshaped for the transposed (hidden, batch) compute layout.
    w1c = w1.reshape(H, 1)
    b1c = b1.reshape(H, 1)
    w2h = w2.astype(jnp.bfloat16)        # bf16 operands for the MXU
    b2c = b2.reshape(H, 1)
    w3c = w3.reshape(H, 1)               # (1,64) -> (64,1) (same element order)
    b3c = b3.reshape(1, 1)

    grid = (n_pad // tile,)
    const_spec = lambda shape: pl.BlockSpec(shape, lambda i: (0, 0))

    out = pl.pallas_call(
        _mlp_kernel,
        out_shape=jax.ShapeDtypeStruct((1, n_pad), x.dtype),
        grid=grid,
        in_specs=[
            pl.BlockSpec((1, tile), lambda i: (0, i)),   # x: streamed per step
            const_spec((H, 1)),                          # w1 (resident)
            const_spec((H, 1)),                          # b1
            const_spec((H, H)),                          # w2 (bf16, resident)
            const_spec((H, 1)),                          # b2
            const_spec((H, 1)),                          # w3
            const_spec((1, 1)),                          # b3
        ],
        out_specs=pl.BlockSpec((1, tile), lambda i: (0, i)),
        compiler_params=pltpu.CompilerParams(
            dimension_semantics=("parallel",),
            vmem_limit_bytes=32 * 1024 * 1024,
        ),
    )(x_row, w1c, b1c, w2h, b2c, w3c, b3c)

    return out[0, :N].reshape(N, 1)


def init_params(key):
    """Deterministic init mimicking torch.nn.Linear default (uniform +-1/sqrt(fan_in)),
    with weights stored in torch layout (out_features, in_features)."""
    k = jax.random.split(key, 6)

    def lin(kw, kb, fan_in, fan_out):
        bound = 1.0 / jnp.sqrt(fan_in)
        w = jax.random.uniform(kw, (fan_out, fan_in), jnp.float32, -bound, bound)
        b = jax.random.uniform(kb, (fan_out,), jnp.float32, -bound, bound)
        return w, b

    w1, b1 = lin(k[0], k[1], 1, 64)
    w2, b2 = lin(k[2], k[3], 64, 64)
    w3, b3 = lin(k[4], k[5], 64, 1)
    return w1, b1, w2, b2, w3, b3


def reference_forward(x, w1, b1, w2, b2, w3, b3):
    # Pure f32 reference (matches the torch module semantics).
    h = jnp.maximum(x @ w1.T + b1, 0.0)
    h = jnp.maximum(h @ w2.T + b2, 0.0)
    return h @ w3.T + b3


if __name__ == "__main__":
    key = jax.random.PRNGKey(0)
    k_params, k_x = jax.random.split(key)
    params = init_params(k_params)

    # Small batch of scalar inputs (angles in [0, 2*pi)), as the module implies.
    N = 8
    x = jax.random.uniform(k_x, (N, 1), jnp.float32, 0.0, 2.0 * jnp.pi)

    y = cosine_module_forward(x, *params)
    jax.block_until_ready(y)

    y_ref = reference_forward(x, *params)
    assert y.shape == (N, 1), y.shape
    # Layer-2 runs with bf16 MXU operands (f32 accumulation), so allow bf16-level error.
    assert jnp.allclose(y, y_ref, atol=2e-2, rtol=2e-2), "mismatch vs reference"

    print("KERNEL_OK")
</pallas_src>

<mosaic_0001>
module attributes {stable_mosaic.version = 11 : i64} {
  func.func @_mlp_kernel(%arg0: i32, %arg1: memref<1x128xf32, #tpu.memory_space<vmem>>, %arg2: memref<64x1xf32, #tpu.memory_space<vmem>>, %arg3: memref<64x1xf32, #tpu.memory_space<vmem>>, %arg4: memref<64x64xbf16, #tpu.memory_space<vmem>>, %arg5: memref<64x1xf32, #tpu.memory_space<vmem>>, %arg6: memref<64x1xf32, #tpu.memory_space<vmem>>, %arg7: memref<1x1xf32, #tpu.memory_space<vmem>>, %arg8: memref<1x128xf32, #tpu.memory_space<vmem>>) attributes {dimension_semantics = [#tpu.dimension_semantics<parallel>], iteration_bounds = array<i64: 1>, scalar_prefetch = 0 : i64, scratch_operands = 0 : i64, tpu.core_type = #tpu.core_type<tc>, window_params = [{transform_indices = @transform_0, window_bounds = array<i64: 1, 128>}, {pipeline_mode = #tpu.pipeline_mode<synchronous>, transform_indices = @transform_1, window_bounds = array<i64: 64, 1>}, {pipeline_mode = #tpu.pipeline_mode<synchronous>, transform_indices = @transform_2, window_bounds = array<i64: 64, 1>}, {pipeline_mode = #tpu.pipeline_mode<synchronous>, transform_indices = @transform_3, window_bounds = array<i64: 64, 64>}, {pipeline_mode = #tpu.pipeline_mode<synchronous>, transform_indices = @transform_4, window_bounds = array<i64: 64, 1>}, {pipeline_mode = #tpu.pipeline_mode<synchronous>, transform_indices = @transform_5, window_bounds = array<i64: 64, 1>}, {pipeline_mode = #tpu.pipeline_mode<synchronous>, transform_indices = @transform_6, window_bounds = array<i64: 1, 1>}, {transform_indices = @transform_7, window_bounds = array<i64: 1, 128>}]} {
    %c0 = arith.constant 0 : index
    %c0_0 = arith.constant 0 : index
    %0 = vector.load %arg1[%c0, %c0_0] : memref<1x128xf32, #tpu.memory_space<vmem>>, vector<1x128xf32>
    %c0_1 = arith.constant 0 : index
    %c0_2 = arith.constant 0 : index
    %1 = vector.load %arg2[%c0_1, %c0_2] : memref<64x1xf32, #tpu.memory_space<vmem>>, vector<64x1xf32>
    %2 = vector.broadcast %1 : vector<64x1xf32> to vector<64x128xf32>
    %3 = vector.broadcast %0 : vector<1x128xf32> to vector<64x128xf32>
    %4 = arith.mulf %2, %3 : vector<64x128xf32>
    %c0_3 = arith.constant 0 : index
    %c0_4 = arith.constant 0 : index
    %5 = vector.load %arg3[%c0_3, %c0_4] : memref<64x1xf32, #tpu.memory_space<vmem>>, vector<64x1xf32>
    %6 = vector.broadcast %5 : vector<64x1xf32> to vector<64x128xf32>
    %7 = arith.addf %4, %6 : vector<64x128xf32>
    %cst = arith.constant 0.000000e+00 : f32
    %8 = vector.broadcast %cst : f32 to vector<64x128xf32>
    %9 = arith.maximumf %7, %8 : vector<64x128xf32>
    %c0_5 = arith.constant 0 : index
    %c0_6 = arith.constant 0 : index
    %10 = vector.load %arg4[%c0_5, %c0_6] : memref<64x64xbf16, #tpu.memory_space<vmem>>, vector<64x64xbf16>
    %11 = arith.truncf %9 : vector<64x128xf32> to vector<64x128xbf16>
    %cst_7 = arith.constant dense<0.000000e+00> : vector<64x128xf32>
    %12 = tpu.matmul %10, %11, %cst_7 {dimension_numbers = #tpu.dot_dimension_numbers<[1], [0], [0], [1], [0, 0, 1, 1], [], []>} : vector<64x64xbf16>, vector<64x128xbf16>, vector<64x128xf32> -> vector<64x128xf32>
    %c0_8 = arith.constant 0 : index
    %c0_9 = arith.constant 0 : index
    %13 = vector.load %arg5[%c0_8, %c0_9] : memref<64x1xf32, #tpu.memory_space<vmem>>, vector<64x1xf32>
    %14 = vector.broadcast %13 : vector<64x1xf32> to vector<64x128xf32>
    %15 = arith.addf %12, %14 : vector<64x128xf32>
    %cst_10 = arith.constant 0.000000e+00 : f32
    %16 = vector.broadcast %cst_10 : f32 to vector<64x128xf32>
    %17 = arith.maximumf %15, %16 : vector<64x128xf32>
    %c0_11 = arith.constant 0 : index
    %c0_12 = arith.constant 0 : index
    %18 = vector.load %arg6[%c0_11, %c0_12] : memref<64x1xf32, #tpu.memory_space<vmem>>, vector<64x1xf32>
    %19 = vector.broadcast %18 : vector<64x1xf32> to vector<64x128xf32>
    %20 = arith.mulf %17, %19 : vector<64x128xf32>
    %21 = vector.extract_strided_slice %20 {offsets = [0, 0], sizes = [8, 128], strides = [1, 1]} : vector<64x128xf32> to vector<8x128xf32>
    %22 = vector.extract_strided_slice %20 {offsets = [8, 0], sizes = [8, 128], strides = [1, 1]} : vector<64x128xf32> to vector<8x128xf32>
    %23 = arith.addf %21, %22 : vector<8x128xf32>
    %24 = vector.extract_strided_slice %20 {offsets = [16, 0], sizes = [8, 128], strides = [1, 1]} : vector<64x128xf32> to vector<8x128xf32>
    %25 = arith.addf %23, %24 : vector<8x128xf32>
    %26 = vector.extract_strided_slice %20 {offsets = [24, 0], sizes = [8, 128], strides = [1, 1]} : vector<64x128xf32> to vector<8x128xf32>
    %27 = arith.addf %25, %26 : vector<8x128xf32>
    %28 = vector.extract_strided_slice %20 {offsets = [32, 0], sizes = [8, 128], strides = [1, 1]} : vector<64x128xf32> to vector<8x128xf32>
    %29 = arith.addf %27, %28 : vector<8x128xf32>
    %30 = vector.extract_strided_slice %20 {offsets = [40, 0], sizes = [8, 128], strides = [1, 1]} : vector<64x128xf32> to vector<8x128xf32>
    %31 = arith.addf %29, %30 : vector<8x128xf32>
    %32 = vector.extract_strided_slice %20 {offsets = [48, 0], sizes = [8, 128], strides = [1, 1]} : vector<64x128xf32> to vector<8x128xf32>
    %33 = arith.addf %31, %32 : vector<8x128xf32>
    %34 = vector.extract_strided_slice %20 {offsets = [56, 0], sizes = [8, 128], strides = [1, 1]} : vector<64x128xf32> to vector<8x128xf32>
    %35 = arith.addf %33, %34 : vector<8x128xf32>
    %cst_13 = arith.constant dense<0.000000e+00> : vector<128xf32>
    %36 = vector.multi_reduction <add>, %35, %cst_13 [0] : vector<8x128xf32> to vector<128xf32>
    %37 = vector.shape_cast %36 : vector<128xf32> to vector<1x128xf32>
    %c0_14 = arith.constant 0 : index
    %c0_15 = arith.constant 0 : index
    %38 = vector.load %arg7[%c0_14, %c0_15] : memref<1x1xf32, #tpu.memory_space<vmem>>, vector<1x1xf32>
    %39 = vector.broadcast %38 : vector<1x1xf32> to vector<1x128xf32>
    %40 = arith.addf %37, %39 : vector<1x128xf32>
    %c0_16 = arith.constant 0 : index
    %c0_17 = arith.constant 0 : index
    %41 = vector.load %arg8[%c0_16, %c0_17] : memref<1x128xf32, #tpu.memory_space<vmem>>, vector<1x128xf32>
    tpu.vector_store %arg8[%c0_16, %c0_17], %40 {strides = array<i32>} : memref<1x128xf32, #tpu.memory_space<vmem>>, vector<1x128xf32>,
    return
  }
  func.func @transform_0(%arg0: i32) -> (i32, i32) {
    %c0_i32 = arith.constant 0 : i32
    %c0_i32_0 = arith.constant 0 : i32
    return %c0_i32, %arg0 : i32, i32
  }
  func.func @transform_1(%arg0: i32) -> (i32, i32) {
    %c0_i32 = arith.constant 0 : i32
    %c0_i32_0 = arith.constant 0 : i32
    %c0_i32_1 = arith.constant 0 : i32
    return %c0_i32, %c0_i32_0 : i32, i32
  }
  func.func @transform_2(%arg0: i32) -> (i32, i32) {
    %c0_i32 = arith.constant 0 : i32
    %c0_i32_0 = arith.constant 0 : i32
    %c0_i32_1 = arith.constant 0 : i32
    return %c0_i32, %c0_i32_0 : i32, i32
  }
  func.func @transform_3(%arg0: i32) -> (i32, i32) {
    %c0_i32 = arith.constant 0 : i32
    %c0_i32_0 = arith.constant 0 : i32
    %c0_i32_1 = arith.constant 0 : i32
    return %c0_i32, %c0_i32_0 : i32, i32
  }
  func.func @transform_4(%arg0: i32) -> (i32, i32) {
    %c0_i32 = arith.constant 0 : i32
    %c0_i32_0 = arith.constant 0 : i32
    %c0_i32_1 = arith.constant 0 : i32
    return %c0_i32, %c0_i32_0 : i32, i32
  }
  func.func @transform_5(%arg0: i32) -> (i32, i32) {
    %c0_i32 = arith.constant 0 : i32
    %c0_i32_0 = arith.constant 0 : i32
    %c0_i32_1 = arith.constant 0 : i32
    return %c0_i32, %c0_i32_0 : i32, i32
  }
  func.func @transform_6(%arg0: i32) -> (i32, i32) {
    %c0_i32 = arith.constant 0 : i32
    %c0_i32_0 = arith.constant 0 : i32
    %c0_i32_1 = arith.constant 0 : i32
    return %c0_i32, %c0_i32_0 : i32, i32
  }
  func.func @transform_7(%arg0: i32) -> (i32, i32) {
    %c0_i32 = arith.constant 0 : i32
    %c0_i32_0 = arith.constant 0 : i32
    return %c0_i32, %arg0 : i32, i32
  }
}

</mosaic_0001>

<llo_original>
// kernel: tpu_custom_call.1
$region0: #{tpu_custom_call.1}
  #allocation0 [shape = 'u32[]', space=smem, size = 0x4, offset = 0x4, fixed_abs, tag = 'smem constant byte address 0x4 - core index']
  #allocation1 [shape = 'u32[144,128]{1,0:T(1,128)}', space=vmem, size = 0x12000, scoped, tag = 'internal scratch']
  #allocation2 [shape = 'f32[1,1]{1,0:T(1,128)S(1)}', space=vmem, size = 0x200, scoped, tag = 'scoped memory for tpu_custom_call.1']
  %s0 = inlined_call_operand.vmem [shape: f32[1,128], index: 0, kind: input, shape index: {}]
  %s1 = inlined_call_operand.vmem [shape: f32[64,1], index: 1, kind: input, shape index: {}]
  %s2 = inlined_call_operand.vmem [shape: f32[64,1], index: 2, kind: input, shape index: {}]
  %s3 = inlined_call_operand.vmem [shape: bf16[64,64], index: 3, kind: input, shape index: {}]
  %s4 = inlined_call_operand.vmem [shape: f32[64,1], index: 4, kind: input, shape index: {}]
  %s5 = inlined_call_operand.vmem [shape: f32[64,1], index: 5, kind: input, shape index: {}]
  %s6 = inlined_call_operand.<no memory space> [shape: f32[1,1], index: 6, kind: input, shape index: {}]
  %s7 = inlined_call_operand.hbm [shape: f32[1,128], index: 7, kind: output, shape index: {}]
  %s8 = sld [smem:[#allocation0]]
  $region38: #{tpu_custom_call.1} parent=0
    _
  %s10 = ssub.s32 1, %s8
  %s11 = scalar_select 0, %s10, %s8
  %v12 = vstv %s6
  %13 = vst [vmem:[#allocation2] sm:$0x1] %v12
  $region1: #{tpu_custom_call.1} parent=0
    #allocation3 [shape = 'u8[512]{0}', space=vmem, size = 0x400, scoped, tag = 'output window, operand 0, single buffered']
    #allocation4 [shape = 's32[1]{0}', space=sflag, size = 0x4, scoped, tag = 'scoped memory for tpu_custom_call.1']
    %14 = vsyncpa [#allocation4], 0
    // Predicated region
    $region2: #{tpu_custom_call.1} parent=1 // pred_check
      _
    $region3: #{tpu_custom_call.1} parent=1 // pred_check_branch
      %16 = sbr.rel (0) target = $region5
    $region4: #{tpu_custom_call.1} parent=1 // pred_region
      _
    $region5: #{tpu_custom_call.1} parent=1 // pred_fallthru
      _
    // Predicated region
    $region6: #{tpu_custom_call.1} parent=1 // pred_check
      _
    $region7: #{tpu_custom_call.1} parent=1 // pred_check_branch
      %18 = sbr.rel (0) target = $region9
    $region8: #{tpu_custom_call.1} parent=1 // pred_region
      _
    $region9: #{tpu_custom_call.1} parent=1 // pred_fallthru
      _
    // Predicated region
    $region10: #{tpu_custom_call.1} parent=1 // pred_check
      _
    $region11: #{tpu_custom_call.1} parent=1 // pred_check_branch
      %20 = sbr.rel (0) target = $region13
    $region12: #{tpu_custom_call.1} parent=1 // pred_region
      _
    $region13: #{tpu_custom_call.1} parent=1 // pred_fallthru
      _
    // Predicated region
    $region14: #{tpu_custom_call.1} parent=1 // pred_check
      _
    $region15: #{tpu_custom_call.1} parent=1 // pred_check_branch
      %22 = sbr.rel (0) target = $region17
    $region16: #{tpu_custom_call.1} parent=1 // pred_region
      _
    $region17: #{tpu_custom_call.1} parent=1 // pred_fallthru
      _
    // Predicated region
    $region18: #{tpu_custom_call.1} parent=1 // pred_check
      _
    $region19: #{tpu_custom_call.1} parent=1 // pred_check_branch
      %24 = sbr.rel (0) target = $region21
    $region20: #{tpu_custom_call.1} parent=1 // pred_region
      _
    $region21: #{tpu_custom_call.1} parent=1 // pred_fallthru
      _
    // Predicated region
    $region22: #{tpu_custom_call.1} parent=1 // pred_check
      _
    $region23: #{tpu_custom_call.1} parent=1 // pred_check_branch
      %26 = sbr.rel (0) target = $region25
    $region24: #{tpu_custom_call.1} parent=1 // pred_region
      _
    $region25: #{tpu_custom_call.1} parent=1 // pred_fallthru
      _
    // Predicated region
    $region26: #{tpu_custom_call.1} parent=1 // pred_check
      _
    $region27: #{tpu_custom_call.1} parent=1 // pred_check_branch
      %28 = sbr.rel (0) target = $region29
    $region28: #{tpu_custom_call.1} parent=1 // pred_region
      _
    $region29: #{tpu_custom_call.1} parent=1 // pred_fallthru
      _
    %v30 = vld [vmem:[%s0] sm:$0x1]
    %v31 = vld [vmem:[%s1] sm:$0xff]
    %v32 = vld [vmem:[%s1 + $0x8] sm:$0xff]
    %v33 = vld [vmem:[%s1 + $0x10] sm:$0xff]
    %v34 = vld [vmem:[%s1 + $0x18] sm:$0xff]
    %v35 = vld [vmem:[%s1 + $0x20] sm:$0xff]
    %v36 = vld [vmem:[%s1 + $0x28] sm:$0xff]
    %v37 = vld [vmem:[%s1 + $0x30] sm:$0xff]
    %v38 = vld [vmem:[%s1 + $0x38] sm:$0xff]
    %40 = vset.pattern.permute.xlu0 0
    %41 = vperm.xlu0 %40, %v31
    %v42 = vpop.permute.xlu0 %41
    %45 = vset.pattern.permute.xlu0 0
    %46 = vperm.xlu0 %45, %v32
    %v47 = vpop.permute.xlu0 %46
    %50 = vset.pattern.permute.xlu0 0
    %51 = vperm.xlu0 %50, %v33
    %v52 = vpop.permute.xlu0 %51
    %55 = vset.pattern.permute.xlu0 0
    %56 = vperm.xlu0 %55, %v34
    %v57 = vpop.permute.xlu0 %56
    %60 = vset.pattern.permute.xlu0 0
    %61 = vperm.xlu0 %60, %v35
    %v62 = vpop.permute.xlu0 %61
    %65 = vset.pattern.permute.xlu0 0
    %66 = vperm.xlu0 %65, %v36
    %v67 = vpop.permute.xlu0 %66
    %70 = vset.pattern.permute.xlu0 0
    %71 = vperm.xlu0 %70, %v37
    %v72 = vpop.permute.xlu0 %71
    %75 = vset.pattern.permute.xlu0 0
    %76 = vperm.xlu0 %75, %v38
    %v77 = vpop.permute.xlu0 %76
    %v80 = vlaneseq
    %v81 = vshrl.u32 %v80, 7
    %v82 = vsub.s32 0, %v81
    %v83 = vrot.slane %v30, %v82
    %v85 = vmul.f32 %v42, %v83
    %v86 = vmul.f32 %v47, %v83
    %v87 = vmul.f32 %v52, %v83
    %v88 = vmul.f32 %v57, %v83
    %v89 = vmul.f32 %v62, %v83
    %v90 = vmul.f32 %v67, %v83
    %v91 = vmul.f32 %v72, %v83
    %v92 = vmul.f32 %v77, %v83
    %v93 = vld [vmem:[%s2] sm:$0xff]
    %v94 = vld [vmem:[%s2 + $0x8] sm:$0xff]
    %v95 = vld [vmem:[%s2 + $0x10] sm:$0xff]
    %v96 = vld [vmem:[%s2 + $0x18] sm:$0xff]
    %v97 = vld [vmem:[%s2 + $0x20] sm:$0xff]
    %v98 = vld [vmem:[%s2 + $0x28] sm:$0xff]
    %v99 = vld [vmem:[%s2 + $0x30] sm:$0xff]
    %v100 = vld [vmem:[%s2 + $0x38] sm:$0xff]
    %102 = vset.pattern.permute.xlu0 0
    %103 = vperm.xlu0 %102, %v93
    %v104 = vpop.permute.xlu0 %103
    %107 = vset.pattern.permute.xlu0 0
    %108 = vperm.xlu0 %107, %v94
    %v109 = vpop.permute.xlu0 %108
    %112 = vset.pattern.permute.xlu0 0
    %113 = vperm.xlu0 %112, %v95
    %v114 = vpop.permute.xlu0 %113
    %117 = vset.pattern.permute.xlu0 0
    %118 = vperm.xlu0 %117, %v96
    %v119 = vpop.permute.xlu0 %118
    %122 = vset.pattern.permute.xlu0 0
    %123 = vperm.xlu0 %122, %v97
    %v124 = vpop.permute.xlu0 %123
    %127 = vset.pattern.permute.xlu0 0
    %128 = vperm.xlu0 %127, %v98
    %v129 = vpop.permute.xlu0 %128
    %132 = vset.pattern.permute.xlu0 0
    %133 = vperm.xlu0 %132, %v99
    %v134 = vpop.permute.xlu0 %133
    %137 = vset.pattern.permute.xlu0 0
    %138 = vperm.xlu0 %137, %v100
    %v139 = vpop.permute.xlu0 %138
    %v141 = vadd.f32 %v85, %v104
    %v142 = vadd.f32 %v86, %v109
    %v143 = vadd.f32 %v87, %v114
    %v144 = vadd.f32 %v88, %v119
    %v145 = vadd.f32 %v89, %v124
    %v146 = vadd.f32 %v90, %v129
    %v147 = vadd.f32 %v91, %v134
    %v148 = vadd.f32 %v92, %v139
    %v149 = vmax.f32 %v141, 0.0
    %v150 = vmax.f32 %v142, 0.0
    %v151 = vmax.f32 %v143, 0.0
    %v152 = vmax.f32 %v144, 0.0
    %v153 = vmax.f32 %v145, 0.0
    %v154 = vmax.f32 %v146, 0.0
    %v155 = vmax.f32 %v147, 0.0
    %v156 = vmax.f32 %v148, 0.0
    %v157 = vld [vmem:[%s3] sm:$0xf]
    %v158 = vld [vmem:[%s3 + $0x4] sm:$0xf]
    %v159 = vld [vmem:[%s3 + $0x8] sm:$0xf]
    %v160 = vld [vmem:[%s3 + $0xc] sm:$0xf]
    %v161 = vld [vmem:[%s3 + $0x10] sm:$0xf]
    %v162 = vld [vmem:[%s3 + $0x14] sm:$0xf]
    %v163 = vld [vmem:[%s3 + $0x18] sm:$0xf]
    %v164 = vld [vmem:[%s3 + $0x1c] sm:$0xf]
    %v165 = vpack.c.bf16 %v150, %v149
    %v166 = vpack.c.bf16 %v152, %v151
    %v167 = vpack.c.bf16 %v154, %v153
    %v168 = vpack.c.bf16 %v156, %v155
    %v169 = vld [vmem:[%s4] sm:$0xff]
    %v170 = vld [vmem:[%s4 + $0x8] sm:$0xff]
    %v171 = vld [vmem:[%s4 + $0x10] sm:$0xff]
    %v172 = vld [vmem:[%s4 + $0x18] sm:$0xff]
    %v173 = vld [vmem:[%s4 + $0x20] sm:$0xff]
    %v174 = vld [vmem:[%s4 + $0x28] sm:$0xff]
    %v175 = vld [vmem:[%s4 + $0x30] sm:$0xff]
    %v176 = vld [vmem:[%s4 + $0x38] sm:$0xff]
    %178 = vset.pattern.permute.xlu0 0
    %179 = vperm.xlu0 %178, %v169
    %v180 = vpop.permute.xlu0 %179
    %183 = vset.pattern.permute.xlu0 0
    %184 = vperm.xlu0 %183, %v170
    %v185 = vpop.permute.xlu0 %184
    %188 = vset.pattern.permute.xlu0 0
    %189 = vperm.xlu0 %188, %v171
    %v190 = vpop.permute.xlu0 %189
    %193 = vset.pattern.permute.xlu0 0
    %194 = vperm.xlu0 %193, %v172
    %v195 = vpop.permute.xlu0 %194
    %198 = vset.pattern.permute.xlu0 0
    %199 = vperm.xlu0 %198, %v173
    %v200 = vpop.permute.xlu0 %199
    %203 = vset.pattern.permute.xlu0 0
    %204 = vperm.xlu0 %203, %v174
    %v205 = vpop.permute.xlu0 %204
    %208 = vset.pattern.permute.xlu0 0
    %209 = vperm.xlu0 %208, %v175
    %v210 = vpop.permute.xlu0 %209
    %213 = vset.pattern.permute.xlu0 0
    %214 = vperm.xlu0 %213, %v176
    %v215 = vpop.permute.xlu0 %214
    %v225 = vunpack.c.l.b16 %v157
    %v226 = vunpack.c.l.b16 %v158
    %v227 = vunpack.c.l.b16 %v159
    %v228 = vunpack.c.l.b16 %v160
    %v229 = vunpack.c.l.b16 %v161
    %v230 = vunpack.c.l.b16 %v162
    %v231 = vunpack.c.l.b16 %v163
    %v232 = vunpack.c.l.b16 %v164
    %v233 = vpack.c.b16 %v226, %v225
    %v234 = vpack.c.b16 %v228, %v227
    %v235 = vpack.c.b16 %v230, %v229
    %v236 = vpack.c.b16 %v232, %v231
    %vm237 = vcmask 523264
    %v239 = vsel %vm237, %v233, 0
    %v242 = vsel %vm237, %v234, 0
    %v245 = vsel %vm237, %v235, 0
    %v248 = vsel %vm237, %v236, 0
    %250 = vmatprep.subr.bf16.mxu0 0
    %251 = vmatpush1.bf16.msra.mxu0 %v165
    %252 = vmatprep.subr.bf16.mxu0 0
    %253 = vmatpush1.bf16.msra.mxu0 %v166
    %254 = vmatprep.subr.bf16.mxu0 0
    %255 = vmatpush1.bf16.msra.mxu0 %v167
    %256 = vmatprep.subr.bf16.mxu0 0
    %257 = vmatpush1.bf16.msra.mxu0 %v168
    %258 = vmatprep.subr.bf16.mxu0 0
    %259 = vmatpush1.bf16.msra.mxu0 0
    %260 = vmatprep.subr.bf16.mxu0 0
    %261 = vmatpush1.bf16.msra.mxu0 0
    %262 = vmatprep.subr.bf16.mxu0 0
    %263 = vmatpush1.bf16.msra.mxu0 0
    %264 = vmatprep.subr.bf16.mxu0 0
    %265 = vmatpush1.bf16.msra.mxu0 0
    %266 = vmatprep.subr.bf16.mxu0 0
    %267 = vmatpush1.bf16.msra.mxu0 0
    %268 = vmatprep.subr.bf16.mxu0 0
    %269 = vmatpush1.bf16.msra.mxu0 0
    %270 = vmatprep.subr.bf16.mxu0 0
    %271 = vmatpush1.bf16.msra.mxu0 0
    %272 = vmatprep.subr.bf16.mxu0 0
    %273 = vmatpush1.bf16.msra.mxu0 0
    %274 = vmatprep.subr.bf16.mxu0 0
    %275 = vmatpush1.bf16.msra.mxu0 0
    %276 = vmatprep.subr.bf16.mxu0 0
    %277 = vmatpush1.bf16.msra.mxu0 0
    %278 = vmatprep.subr.bf16.mxu0 0
    %279 = vmatpush1.bf16.msra.mxu0 0
    %280 = vmatprep.subr.bf16.mxu0 0
    %281 = vmatpush1.bf16.msra.mxu0 0
    %282 = vmatprep.mubr.bf16.mxu0 0
    %283 = vmatmul.mubr.bf16.gmra.mrb[0].mxu0 %v239
    %v284 = vpop.f32.mrb[0].mxu0
    %v285 = vadd.f32 %v180, %v284
    %v286 = vpop.f32.mrb[0].mxu0
    %v287 = vpop.f32.mrb[0].mxu0
    %v288 = vadd.f32 %v185, %v287
    %v289 = vpop.f32.mrb[0].mxu0
    %290 = vmatprep.mubr.bf16.mxu0 0
    %291 = vmatmul.mubr.bf16.gmra.mrb[0].mxu0 %v242
    %v292 = vpop.f32.mrb[0].mxu0
    %v293 = vadd.f32 %v190, %v292
    %v294 = vpop.f32.mrb[0].mxu0
    %v295 = vpop.f32.mrb[0].mxu0
    %v296 = vadd.f32 %v195, %v295
    %v297 = vpop.f32.mrb[0].mxu0
    %298 = vmatprep.mubr.bf16.mxu0 0
    %299 = vmatmul.mubr.bf16.gmra.mrb[0].mxu0 %v245
    %v300 = vpop.f32.mrb[0].mxu0
    %v301 = vadd.f32 %v200, %v300
    %v302 = vpop.f32.mrb[0].mxu0
    %v303 = vpop.f32.mrb[0].mxu0
    %v304 = vadd.f32 %v205, %v303
    %v305 = vpop.f32.mrb[0].mxu0
    %306 = vmatprep.mubr.bf16.mxu0 0
    %307 = vmatmul.mubr.bf16.gmra.mrb[0].mxu0 %v248
    %v308 = vpop.f32.mrb[0].mxu0
    %v309 = vadd.f32 %v210, %v308
    %v310 = vpop.f32.mrb[0].mxu0
    %v311 = vpop.f32.mrb[0].mxu0
    %v312 = vadd.f32 %v215, %v311
    %v313 = vpop.f32.mrb[0].mxu0
    %314 = vdwg.mxu0
    %v315 = vmax.f32 %v285, 0.0
    %v316 = vmax.f32 %v288, 0.0
    %v317 = vmax.f32 %v293, 0.0
    %v318 = vmax.f32 %v296, 0.0
    %v319 = vmax.f32 %v301, 0.0
    %v320 = vmax.f32 %v304, 0.0
    %v321 = vmax.f32 %v309, 0.0
    %v322 = vmax.f32 %v312, 0.0
    %v323 = vld [vmem:[%s5] sm:$0xff]
    %v324 = vld [vmem:[%s5 + $0x8] sm:$0xff]
    %v325 = vld [vmem:[%s5 + $0x10] sm:$0xff]
    %v326 = vld [vmem:[%s5 + $0x18] sm:$0xff]
    %v327 = vld [vmem:[%s5 + $0x20] sm:$0xff]
    %v328 = vld [vmem:[%s5 + $0x28] sm:$0xff]
    %v329 = vld [vmem:[%s5 + $0x30] sm:$0xff]
    %v330 = vld [vmem:[%s5 + $0x38] sm:$0xff]
    %332 = vset.pattern.permute.xlu0 0
    %333 = vperm.xlu0 %332, %v323
    %v334 = vpop.permute.xlu0 %333
    %337 = vset.pattern.permute.xlu0 0
    %338 = vperm.xlu0 %337, %v324
    %v339 = vpop.permute.xlu0 %338
    %342 = vset.pattern.permute.xlu0 0
    %343 = vperm.xlu0 %342, %v325
    %v344 = vpop.permute.xlu0 %343
    %347 = vset.pattern.permute.xlu0 0
    %348 = vperm.xlu0 %347, %v326
    %v349 = vpop.permute.xlu0 %348
    %352 = vset.pattern.permute.xlu0 0
    %353 = vperm.xlu0 %352, %v327
    %v354 = vpop.permute.xlu0 %353
    %357 = vset.pattern.permute.xlu0 0
    %358 = vperm.xlu0 %357, %v328
    %v359 = vpop.permute.xlu0 %358
    %362 = vset.pattern.permute.xlu0 0
    %363 = vperm.xlu0 %362, %v329
    %v364 = vpop.permute.xlu0 %363
    %367 = vset.pattern.permute.xlu0 0
    %368 = vperm.xlu0 %367, %v330
    %v369 = vpop.permute.xlu0 %368
    %v371 = vmul.f32 %v315, %v334
    %v372 = vmul.f32 %v316, %v339
    %v373 = vmul.f32 %v317, %v344
    %v374 = vmul.f32 %v318, %v349
    %v375 = vmul.f32 %v319, %v354
    %v376 = vmul.f32 %v320, %v359
    %v377 = vmul.f32 %v321, %v364
    %v378 = vmul.f32 %v322, %v369
    %v379 = vadd.f32 %v371, %v372
    %v380 = vadd.f32 %v379, %v373
    %v381 = vadd.f32 %v380, %v374
    %v382 = vadd.f32 %v381, %v375
    %v383 = vadd.f32 %v382, %v376
    %v384 = vadd.f32 %v383, %v377
    %v385 = vadd.f32 %v384, %v378
    %v386 = vrot.slane %v385, 4
    %v387 = vadd.f32 %v385, %v386
    %v388 = vrot.slane %v387, 2
    %v389 = vadd.f32 %v387, %v388
    %v390 = vrot.slane %v389, 1
    %v391 = vadd.f32 %v389, %v390
    %v392 = vld [vmem:[#allocation2] sm:$0x1]
    %394 = vset.pattern.permute.xlu0 0
    %395 = vperm.xlu0 %394, %v392
    %v396 = vpop.permute.xlu0 %395
    %v398 = vlaneseq
    %v399 = vshrl.u32 %v398, 7
    %v400 = vsub.s32 0, %v399
    %v401 = vrot.slane %v396, %v400
    %v402 = vadd.f32 %v391, %v401
    %403 = vst [vmem:[#allocation3] sm:$0x1] %v402
    // Predicated region
    $region30: #{tpu_custom_call.1} parent=1 // pred_check
      _
    $region31: #{tpu_custom_call.1} parent=1 // pred_check_branch
      %405 = sbr.rel (0) target = $region33
    $region32: #{tpu_custom_call.1} parent=1 // pred_region
      %s407 = ssub.s32 16, 16
      %408 = vsyncadd [#allocation4], %s407
      %s410 = sshll.u32 [#allocation3], 4
      %s411 = int_to_ptr.vmem [resolvable:$true] %s410
      %413 = dma.vmem_to_hbm [thread:$0]  %s411, 16, %s7, [#allocation4]
    $region33: #{tpu_custom_call.1} parent=1 // pred_fallthru
      _
    // Predicated region
    $region34: #{tpu_custom_call.1} parent=1 // pred_check
      _
    $region35: #{tpu_custom_call.1} parent=1 // pred_check_branch
      %415 = sbr.rel (0) target = $region37
    $region36: #{tpu_custom_call.1} parent=1 // pred_region
      %416 = dma.done [#allocation4], 16
    $region37: #{tpu_custom_call.1} parent=1 // pred_fallthru
      _
    %417 = vsyncpa [#allocation4], 1

</llo_original>
